<compile_context>
chip_gen: v7x
topology: tpu7x:2x2x1
jax: 0.10.0
libtpu: 0.0.40
codegen_flags: <defaults>
</compile_context>

<pallas_src>
import jax
import jax.numpy as jnp
from jax.experimental import pallas as pl
from jax.experimental.pallas import tpu as pltpu  # noqa: F401  (TPU backend)

HIDDEN = 100       # forced by torch.split(out, 100, dim=-1) in the reference code
HIDDEN_PAD = 128   # lane-aligned gate width: one full 128-lane slab per gate
INPUT_SZ = 32
BATCH = 8


def lstm_cell_kernel(xh_ref, c_ref, w_ref, bias_ref, h_out_ref, c_out_ref):
    HP = HIDDEN_PAD
    # One fused MXU matmul over the concatenated [x | h] LHS, f32 accumulation,
    # bias folded into the same expression.
    gates = (
        jnp.dot(xh_ref[...], w_ref[...], preferred_element_type=jnp.float32)
        + bias_ref[...]                      # (1, 4*HP) broadcasts over batch
    )
    # Each gate is an aligned 128-lane slab -> static views, no relayout copies.
    i_g = jax.nn.sigmoid(gates[:, 0 * HP:1 * HP])
    f_g = jax.nn.sigmoid(gates[:, 1 * HP:2 * HP])
    g_g = jnp.tanh(gates[:, 2 * HP:3 * HP])
    o_g = jax.nn.sigmoid(gates[:, 3 * HP:4 * HP])

    c_t = f_g * c_ref[...] + i_g * g_g       # elementwise on VPU, tanh/sigmoid on EUP
    h_t = o_g * jnp.tanh(c_t)

    c_out_ref[...] = c_t.astype(c_out_ref.dtype)
    h_out_ref[...] = h_t.astype(h_out_ref.dtype)


def _pad_gates(w, h, hp):
    """Zero-pad the last (4*h) axis per gate to (4*hp) so every gate occupies a
    full aligned 128-lane slab: [..., 4*h] -> [..., 4*hp]."""
    lead = w.shape[:-1]
    w4 = w.reshape(*lead, 4, h)
    w4 = jnp.pad(w4, [(0, 0)] * len(lead) + [(0, 0), (0, hp - h)])
    return w4.reshape(*lead, 4 * hp)


def lstm_cell_forward(x, h, c, weight_ih, weight_hh, bias_ih, bias_hh):
    B = x.shape[0]
    H, HP = HIDDEN, HIDDEN_PAD

    # ---- JAX-level prep (pure glue; the weight/bias padding is constant and can
    # be folded / precomputed once if the cell is jitted or reused) ----
    wih_p = _pad_gates(weight_ih, H, HP)                  # [I,  4*HP]
    whh_p = _pad_gates(weight_hh, H, HP)                  # [H,  4*HP]
    whh_p = jnp.pad(whh_p, ((0, HP - H), (0, 0)))         # [HP, 4*HP] (rows match padded h)
    w = jnp.concatenate([wih_p, whh_p], axis=0)           # [I+HP, 4*HP] = [160, 512]
    bias = _pad_gates(bias_ih + bias_hh, H, HP).reshape(1, 4 * HP)

    h_p = jnp.pad(h, ((0, 0), (0, HP - H)))               # [B, HP]
    c_p = jnp.pad(c, ((0, 0), (0, HP - H)))               # [B, HP]
    xh = jnp.concatenate([x, h_p], axis=-1)               # [B, I+HP] = [B, 160]

    full = lambda shape: pl.BlockSpec(shape, lambda: tuple(0 for _ in shape))

    h_t, c_t = pl.pallas_call(
        lstm_cell_kernel,
        grid=(),
        in_specs=[
            full(xh.shape),
            full(c_p.shape),
            full(w.shape),
            full(bias.shape),
        ],
        out_specs=[
            full((B, HP)),
            full((B, HP)),
        ],
        out_shape=(
            jax.ShapeDtypeStruct((B, HP), x.dtype),   # h_t follows input dtype
            jax.ShapeDtypeStruct((B, HP), c.dtype),   # c_t follows cell-state dtype
        ),
    )(xh, c_p, w, bias)

    # Slice the lane padding off at the JAX level (padded lanes are exact zeros).
    return h_t[:, :H], c_t[:, :H]


def reference_forward(x, h, c, weight_ih, weight_hh, bias_ih, bias_hh):
    H = HIDDEN
    out = x @ weight_ih + h @ weight_hh + bias_ih + bias_hh
    i = jax.nn.sigmoid(out[:, 0 * H:1 * H])
    f = jax.nn.sigmoid(out[:, 1 * H:2 * H])
    g = jnp.tanh(out[:, 2 * H:3 * H])
    o = jax.nn.sigmoid(out[:, 3 * H:4 * H])
    c_t = f * c + i * g
    h_t = o * jnp.tanh(c_t)
    return h_t, c_t


if __name__ == "__main__":
    key = jax.random.PRNGKey(0)
    k_x, k_h, k_c, k_wih, k_whh = jax.random.split(key, 5)

    x = jax.random.normal(k_x, (BATCH, INPUT_SZ), dtype=jnp.float32)
    h = jax.random.normal(k_h, (BATCH, HIDDEN), dtype=jnp.float32)
    c = jax.random.normal(k_c, (BATCH, HIDDEN), dtype=jnp.float32)

    # Parameters: randn weights, zero biases (matches the module __init__).
    weight_ih = jax.random.normal(k_wih, (INPUT_SZ, 4 * HIDDEN), dtype=jnp.float32)
    weight_hh = jax.random.normal(k_whh, (HIDDEN, 4 * HIDDEN), dtype=jnp.float32)
    bias_ih = jnp.zeros((4 * HIDDEN,), dtype=jnp.float32)
    bias_hh = jnp.zeros((4 * HIDDEN,), dtype=jnp.float32)

    h_t, c_t = lstm_cell_forward(x, h, c, weight_ih, weight_hh, bias_ih, bias_hh)
    jax.block_until_ready((h_t, c_t))

    # Correctness check against a pure-JAX reference of the PyTorch forward.
    h_ref, c_ref = reference_forward(x, h, c, weight_ih, weight_hh, bias_ih, bias_hh)
    assert h_t.shape == (BATCH, HIDDEN) and c_t.shape == (BATCH, HIDDEN)
    assert jnp.allclose(h_t, h_ref, atol=1e-5, rtol=1e-5), "h_t mismatch"
    assert jnp.allclose(c_t, c_ref, atol=1e-5, rtol=1e-5), "c_t mismatch"

    print("KERNEL_OK")
</pallas_src>

<mosaic_0001>
module attributes {stable_mosaic.version = 11 : i64} {
  func.func @lstm_cell_kernel(%arg0: memref<8x160xf32, #tpu.memory_space<vmem>>, %arg1: memref<8x128xf32, #tpu.memory_space<vmem>>, %arg2: memref<160x512xf32, #tpu.memory_space<vmem>>, %arg3: memref<1x512xf32, #tpu.memory_space<vmem>>, %arg4: memref<8x128xf32, #tpu.memory_space<vmem>>, %arg5: memref<8x128xf32, #tpu.memory_space<vmem>>) attributes {dimension_semantics = [], scalar_prefetch = 0 : i64, scratch_operands = 0 : i64, tpu.core_type = #tpu.core_type<tc>} {
    %c0 = arith.constant 0 : index
    %c0_0 = arith.constant 0 : index
    %0 = vector.load %arg0[%c0, %c0_0] : memref<8x160xf32, #tpu.memory_space<vmem>>, vector<8x160xf32>
    %c0_1 = arith.constant 0 : index
    %c0_2 = arith.constant 0 : index
    %1 = vector.load %arg2[%c0_1, %c0_2] : memref<160x512xf32, #tpu.memory_space<vmem>>, vector<160x512xf32>
    %cst = arith.constant dense<0.000000e+00> : vector<8x512xf32>
    %2 = tpu.matmul %0, %1, %cst {dimension_numbers = #tpu.dot_dimension_numbers<[1], [0], [0], [1], [0, 0, 1, 1], [], []>} : vector<8x160xf32>, vector<160x512xf32>, vector<8x512xf32> -> vector<8x512xf32>
    %c0_3 = arith.constant 0 : index
    %c0_4 = arith.constant 0 : index
    %3 = vector.load %arg3[%c0_3, %c0_4] : memref<1x512xf32, #tpu.memory_space<vmem>>, vector<1x512xf32>
    %4 = vector.broadcast %3 : vector<1x512xf32> to vector<8x512xf32>
    %5 = arith.addf %2, %4 : vector<8x512xf32>
    %6 = vector.extract_strided_slice %5 {offsets = [0, 0], sizes = [8, 128], strides = [1, 1]} : vector<8x512xf32> to vector<8x128xf32>
    %7 = arith.negf %6 : vector<8x128xf32>
    %8 = math.exp %7 : vector<8x128xf32>
    %cst_5 = arith.constant 1.000000e+00 : f32
    %9 = vector.broadcast %cst_5 : f32 to vector<8x128xf32>
    %10 = arith.addf %9, %8 : vector<8x128xf32>
    %11 = arith.divf %9, %10 : vector<8x128xf32>
    %12 = vector.extract_strided_slice %5 {offsets = [0, 128], sizes = [8, 128], strides = [1, 1]} : vector<8x512xf32> to vector<8x128xf32>
    %13 = arith.negf %12 : vector<8x128xf32>
    %14 = math.exp %13 : vector<8x128xf32>
    %cst_6 = arith.constant 1.000000e+00 : f32
    %15 = vector.broadcast %cst_6 : f32 to vector<8x128xf32>
    %16 = arith.addf %15, %14 : vector<8x128xf32>
    %17 = arith.divf %15, %16 : vector<8x128xf32>
    %18 = vector.extract_strided_slice %5 {offsets = [0, 256], sizes = [8, 128], strides = [1, 1]} : vector<8x512xf32> to vector<8x128xf32>
    %19 = math.tanh %18 : vector<8x128xf32>
    %20 = vector.extract_strided_slice %5 {offsets = [0, 384], sizes = [8, 128], strides = [1, 1]} : vector<8x512xf32> to vector<8x128xf32>
    %21 = arith.negf %20 : vector<8x128xf32>
    %22 = math.exp %21 : vector<8x128xf32>
    %cst_7 = arith.constant 1.000000e+00 : f32
    %23 = vector.broadcast %cst_7 : f32 to vector<8x128xf32>
    %24 = arith.addf %23, %22 : vector<8x128xf32>
    %25 = arith.divf %23, %24 : vector<8x128xf32>
    %c0_8 = arith.constant 0 : index
    %c0_9 = arith.constant 0 : index
    %26 = vector.load %arg1[%c0_8, %c0_9] : memref<8x128xf32, #tpu.memory_space<vmem>>, vector<8x128xf32>
    %27 = arith.mulf %17, %26 : vector<8x128xf32>
    %28 = arith.mulf %11, %19 : vector<8x128xf32>
    %29 = arith.addf %27, %28 : vector<8x128xf32>
    %30 = math.tanh %29 : vector<8x128xf32>
    %31 = arith.mulf %25, %30 : vector<8x128xf32>
    %c0_10 = arith.constant 0 : index
    %c0_11 = arith.constant 0 : index
    %32 = vector.load %arg5[%c0_10, %c0_11] : memref<8x128xf32, #tpu.memory_space<vmem>>, vector<8x128xf32>
    tpu.vector_store %arg5[%c0_10, %c0_11], %29 {strides = array<i32>} : memref<8x128xf32, #tpu.memory_space<vmem>>, vector<8x128xf32>,
    %c0_12 = arith.constant 0 : index
    %c0_13 = arith.constant 0 : index
    %33 = vector.load %arg4[%c0_12, %c0_13] : memref<8x128xf32, #tpu.memory_space<vmem>>, vector<8x128xf32>
    tpu.vector_store %arg4[%c0_12, %c0_13], %31 {strides = array<i32>} : memref<8x128xf32, #tpu.memory_space<vmem>>, vector<8x128xf32>,
    return
  }
}

</mosaic_0001>

<llo_original>
// kernel: tpu_custom_call.1
$region0: #{tpu_custom_call.1}
  #allocation0 [shape = 'u32[]', space=smem, size = 0x4, offset = 0x4, fixed_abs, tag = 'smem constant byte address 0x4 - core index']
  #allocation1 [shape = 'u32[144,128]{1,0:T(1,128)}', space=vmem, size = 0x12000, scoped, tag = 'internal scratch']
  %s0 = inlined_call_operand.hbm [shape: f32[8,160], index: 0, kind: input, shape index: {}]
  %s1 = inlined_call_operand.hbm [shape: f32[8,128], index: 1, kind: input, shape index: {}]
  %s2 = inlined_call_operand.hbm [shape: f32[160,512], index: 2, kind: input, shape index: {}]
  %s3 = inlined_call_operand.vmem [shape: f32[1,512], index: 3, kind: input, shape index: {}]
  %s4 = inlined_call_operand.hbm [shape: f32[8,128], index: 4, kind: output, shape index: {0}]
  %s5 = inlined_call_operand.hbm [shape: f32[8,128], index: 5, kind: output, shape index: {1}]
  %6 = xla_tuple %s4, %s5
  %s7 = sld [smem:[#allocation0]]
  $region46: #{tpu_custom_call.1} parent=0
    _
  %s9 = ssub.s32 1, %s7
  %s10 = scalar_select 0, %s9, %s7
  $region1: #{tpu_custom_call.1} parent=0
    #allocation2 [shape = 'u8[8192]{0}', space=vmem, size = 0x2000, scoped, tag = 'input window, operand 0, single buffered']
    #allocation3 [shape = 's32[1]{0}', space=sflag, size = 0x4, scoped, tag = 'scoped memory for tpu_custom_call.1']
    #allocation4 [shape = 's32[1]{0}', space=sflag, size = 0x4, scoped, tag = 'scoped memory for tpu_custom_call.1']
    #allocation5 [shape = 'u8[4096]{0}', space=vmem, size = 0x1000, scoped, tag = 'input window, operand 1, single buffered']
    #allocation6 [shape = 's32[1]{0}', space=sflag, size = 0x4, scoped, tag = 'scoped memory for tpu_custom_call.1']
    #allocation7 [shape = 'u8[327680]{0}', space=vmem, size = 0x50000, scoped, tag = 'input window, operand 2, single buffered']
    #allocation8 [shape = 'u8[4096]{0}', space=vmem, size = 0x1000, scoped, tag = 'output window, operand 0, single buffered']
    #allocation9 [shape = 'u8[4096]{0}', space=vmem, size = 0x1000, scoped, tag = 'output window, operand 1, single buffered']
    #allocation10 [shape = 's32[1]{0}', space=sflag, size = 0x4, scoped, tag = 'scoped memory for tpu_custom_call.1']
    %11 = vsyncpa [#allocation3], 0
    %12 = vsyncpa [#allocation6], 0
    %13 = vsyncpa [#allocation4], 0
    %14 = vsyncpa [#allocation10], 0
    // Predicated region
    $region2: #{tpu_custom_call.1} parent=1 // pred_check
      _
    $region3: #{tpu_custom_call.1} parent=1 // pred_check_branch
      %16 = sbr.rel (0) target = $region5
    $region4: #{tpu_custom_call.1} parent=1 // pred_region
      %s18 = ssub.s32 256, 256
      %19 = vsyncadd [#allocation3], %s18
      %s21 = sshll.u32 [#allocation2], 4
      %s22 = int_to_ptr.vmem [resolvable:$true] %s21
      %24 = dma.hbm_to_vmem [thread:$0]  %s0, 256, %s22, [#allocation3]
    $region5: #{tpu_custom_call.1} parent=1 // pred_fallthru
      _
    // Predicated region
    $region6: #{tpu_custom_call.1} parent=1 // pred_check
      _
    $region7: #{tpu_custom_call.1} parent=1 // pred_check_branch
      %26 = sbr.rel (0) target = $region9
    $region8: #{tpu_custom_call.1} parent=1 // pred_region
      %s28 = ssub.s32 128, 128
      %29 = vsyncadd [#allocation6], %s28
      %s31 = sshll.u32 [#allocation5], 4
      %s32 = int_to_ptr.vmem [resolvable:$true] %s31
      %34 = dma.hbm_to_vmem [thread:$0]  %s1, 128, %s32, [#allocation6]
    $region9: #{tpu_custom_call.1} parent=1 // pred_fallthru
      _
    // Predicated region
    $region10: #{tpu_custom_call.1} parent=1 // pred_check
      _
    $region11: #{tpu_custom_call.1} parent=1 // pred_check_branch
      %36 = sbr.rel (0) target = $region13
    $region12: #{tpu_custom_call.1} parent=1 // pred_region
      %s38 = ssub.s32 10240, 10240
      %39 = vsyncadd [#allocation6], %s38
      %s40 = sshll.u32 [#allocation7], 4
      %s41 = int_to_ptr.vmem [resolvable:$true] %s40
      %46 = dma.hbm_to_vmem [thread:$0]  %s2, 10240, %s41, [#allocation6], 512, 512, 32
    $region13: #{tpu_custom_call.1} parent=1 // pred_fallthru
      _
    // Predicated region
    $region14: #{tpu_custom_call.1} parent=1 // pred_check
      _
    $region15: #{tpu_custom_call.1} parent=1 // pred_check_branch
      %48 = sbr.rel (0) target = $region17
    $region16: #{tpu_custom_call.1} parent=1 // pred_region
      _
    $region17: #{tpu_custom_call.1} parent=1 // pred_fallthru
      _
    // Predicated region
    $region18: #{tpu_custom_call.1} parent=1 // pred_check
      _
    $region19: #{tpu_custom_call.1} parent=1 // pred_check_branch
      %50 = sbr.rel (0) target = $region21
    $region20: #{tpu_custom_call.1} parent=1 // pred_region
      %51 = dma.done [#allocation3], 256
    $region21: #{tpu_custom_call.1} parent=1 // pred_fallthru
      _
    // Predicated region
    $region22: #{tpu_custom_call.1} parent=1 // pred_check
      _
    $region23: #{tpu_custom_call.1} parent=1 // pred_check_branch
      %53 = sbr.rel (0) target = $region25
    $region24: #{tpu_custom_call.1} parent=1 // pred_region
      %54 = dma.done [#allocation6], 128
    $region25: #{tpu_custom_call.1} parent=1 // pred_fallthru
      _
    // Predicated region
    $region26: #{tpu_custom_call.1} parent=1 // pred_check
      _
    $region27: #{tpu_custom_call.1} parent=1 // pred_check_branch
      %56 = sbr.rel (0) target = $region29
    $region28: #{tpu_custom_call.1} parent=1 // pred_region
      %57 = dma.done [#allocation6], 10240
    $region29: #{tpu_custom_call.1} parent=1 // pred_fallthru
      _
    %v58 = vld [vmem:[#allocation2] sm:$0xff]
    %v59 = vld [vmem:[#allocation2 + $0x8] sm:$0xff]
    %v60 = vld [vmem:[#allocation7] sm:$0xff]
    %v61 = vld [vmem:[#allocation7 + $0x8] sm:$0xff]
    %v62 = vld [vmem:[#allocation7 + $0x10] sm:$0xff]
    %v63 = vld [vmem:[#allocation7 + $0x18] sm:$0xff]
    %v64 = vld [vmem:[#allocation7 + $0x20] sm:$0xff]
    %v65 = vld [vmem:[#allocation7 + $0x28] sm:$0xff]
    %v66 = vld [vmem:[#allocation7 + $0x30] sm:$0xff]
    %v67 = vld [vmem:[#allocation7 + $0x38] sm:$0xff]
    %v68 = vld [vmem:[#allocation7 + $0x40] sm:$0xff]
    %v69 = vld [vmem:[#allocation7 + $0x48] sm:$0xff]
    %v70 = vld [vmem:[#allocation7 + $0x50] sm:$0xff]
    %v71 = vld [vmem:[#allocation7 + $0x58] sm:$0xff]
    %v72 = vld [vmem:[#allocation7 + $0x60] sm:$0xff]
    %v73 = vld [vmem:[#allocation7 + $0x68] sm:$0xff]
    %v74 = vld [vmem:[#allocation7 + $0x70] sm:$0xff]
    %v75 = vld [vmem:[#allocation7 + $0x78] sm:$0xff]
    %v76 = vld [vmem:[#allocation7 + $0x80] sm:$0xff]
    %v77 = vld [vmem:[#allocation7 + $0x88] sm:$0xff]
    %v78 = vld [vmem:[#allocation7 + $0x90] sm:$0xff]
    %v79 = vld [vmem:[#allocation7 + $0x98] sm:$0xff]
    %v80 = vld [vmem:[#allocation7 + $0xa0] sm:$0xff]
    %v81 = vld [vmem:[#allocation7 + $0xa8] sm:$0xff]
    %v82 = vld [vmem:[#allocation7 + $0xb0] sm:$0xff]
    %v83 = vld [vmem:[#allocation7 + $0xb8] sm:$0xff]
    %v84 = vld [vmem:[#allocation7 + $0xc0] sm:$0xff]
    %v85 = vld [vmem:[#allocation7 + $0xc8] sm:$0xff]
    %v86 = vld [vmem:[#allocation7 + $0xd0] sm:$0xff]
    %v87 = vld [vmem:[#allocation7 + $0xd8] sm:$0xff]
    %v88 = vld [vmem:[#allocation7 + $0xe0] sm:$0xff]
    %v89 = vld [vmem:[#allocation7 + $0xe8] sm:$0xff]
    %v90 = vld [vmem:[#allocation7 + $0xf0] sm:$0xff]
    %v91 = vld [vmem:[#allocation7 + $0xf8] sm:$0xff]
    %v92 = vld [vmem:[#allocation7 + $0x100] sm:$0xff]
    %v93 = vld [vmem:[#allocation7 + $0x108] sm:$0xff]
    %v94 = vld [vmem:[#allocation7 + $0x110] sm:$0xff]
    %v95 = vld [vmem:[#allocation7 + $0x118] sm:$0xff]
    %v96 = vld [vmem:[#allocation7 + $0x120] sm:$0xff]
    %v97 = vld [vmem:[#allocation7 + $0x128] sm:$0xff]
    %v98 = vld [vmem:[#allocation7 + $0x130] sm:$0xff]
    %v99 = vld [vmem:[#allocation7 + $0x138] sm:$0xff]
    %v100 = vld [vmem:[#allocation7 + $0x140] sm:$0xff]
    %v101 = vld [vmem:[#allocation7 + $0x148] sm:$0xff]
    %v102 = vld [vmem:[#allocation7 + $0x150] sm:$0xff]
    %v103 = vld [vmem:[#allocation7 + $0x158] sm:$0xff]
    %v104 = vld [vmem:[#allocation7 + $0x160] sm:$0xff]
    %v105 = vld [vmem:[#allocation7 + $0x168] sm:$0xff]
    %v106 = vld [vmem:[#allocation7 + $0x170] sm:$0xff]
    %v107 = vld [vmem:[#allocation7 + $0x178] sm:$0xff]
    %v108 = vld [vmem:[#allocation7 + $0x180] sm:$0xff]
    %v109 = vld [vmem:[#allocation7 + $0x188] sm:$0xff]
    %v110 = vld [vmem:[#allocation7 + $0x190] sm:$0xff]
    %v111 = vld [vmem:[#allocation7 + $0x198] sm:$0xff]
    %v112 = vld [vmem:[#allocation7 + $0x1a0] sm:$0xff]
    %v113 = vld [vmem:[#allocation7 + $0x1a8] sm:$0xff]
    %v114 = vld [vmem:[#allocation7 + $0x1b0] sm:$0xff]
    %v115 = vld [vmem:[#allocation7 + $0x1b8] sm:$0xff]
    %v116 = vld [vmem:[#allocation7 + $0x1c0] sm:$0xff]
    %v117 = vld [vmem:[#allocation7 + $0x1c8] sm:$0xff]
    %v118 = vld [vmem:[#allocation7 + $0x1d0] sm:$0xff]
    %v119 = vld [vmem:[#allocation7 + $0x1d8] sm:$0xff]
    %v120 = vld [vmem:[#allocation7 + $0x1e0] sm:$0xff]
    %v121 = vld [vmem:[#allocation7 + $0x1e8] sm:$0xff]
    %v122 = vld [vmem:[#allocation7 + $0x1f0] sm:$0xff]
    %v123 = vld [vmem:[#allocation7 + $0x1f8] sm:$0xff]
    %v124 = vld [vmem:[#allocation7 + $0x200] sm:$0xff]
    %v125 = vld [vmem:[#allocation7 + $0x208] sm:$0xff]
    %v126 = vld [vmem:[#allocation7 + $0x210] sm:$0xff]
    %v127 = vld [vmem:[#allocation7 + $0x218] sm:$0xff]
    %v128 = vld [vmem:[#allocation7 + $0x220] sm:$0xff]
    %v129 = vld [vmem:[#allocation7 + $0x228] sm:$0xff]
    %v130 = vld [vmem:[#allocation7 + $0x230] sm:$0xff]
    %v131 = vld [vmem:[#allocation7 + $0x238] sm:$0xff]
    %v132 = vld [vmem:[#allocation7 + $0x240] sm:$0xff]
    %v133 = vld [vmem:[#allocation7 + $0x248] sm:$0xff]
    %v134 = vld [vmem:[#allocation7 + $0x250] sm:$0xff]
    %v135 = vld [vmem:[#allocation7 + $0x258] sm:$0xff]
    %v136 = vld [vmem:[#allocation7 + $0x260] sm:$0xff]
    %v137 = vld [vmem:[#allocation7 + $0x268] sm:$0xff]
    %v138 = vld [vmem:[#allocation7 + $0x270] sm:$0xff]
    %v139 = vld [vmem:[#allocation7 + $0x278] sm:$0xff]
    %v140 = vld [vmem:[%s3] sm:$0xf]
    %v142 = vlaneseq
    %v143 = vshrl.u32 %v142, 7
    %v144 = vsub.s32 0, %v143
    %v145 = vrot.slane %v140, %v144
    %v146 = vlaneseq
    %v147 = vshrl.u32 %v146, 7
    %v148 = vsub.s32 1, %v147
    %v149 = vrot.slane %v140, %v148
    %v150 = vlaneseq
    %v151 = vshrl.u32 %v150, 7
    %v152 = vsub.s32 2, %v151
    %v153 = vrot.slane %v140, %v152
    %v154 = vlaneseq
    %v155 = vshrl.u32 %v154, 7
    %v156 = vsub.s32 3, %v155
    %v157 = vrot.slane %v140, %v156
    %vm162 = vcmask 261120
    %v164 = vsel %vm162, %v59, 0
    %166 = vmatprep.subr.mxu0 %v61
    %167 = vmatpush1.msra.mxu0 %v60
    %168 = vmatprep.subr.mxu0 %v65
    %169 = vmatpush1.msra.mxu0 %v64
    %170 = vmatprep.subr.mxu0 %v69
    %171 = vmatpush1.msra.mxu0 %v68
    %172 = vmatprep.subr.mxu0 %v73
    %173 = vmatpush1.msra.mxu0 %v72
    %174 = vmatprep.subr.mxu0 %v77
    %175 = vmatpush1.msra.mxu0 %v76
    %176 = vmatprep.subr.mxu0 %v81
    %177 = vmatpush1.msra.mxu0 %v80
    %178 = vmatprep.subr.mxu0 %v85
    %179 = vmatpush1.msra.mxu0 %v84
    %180 = vmatprep.subr.mxu0 %v89
    %181 = vmatpush1.msra.mxu0 %v88
    %182 = vmatprep.subr.mxu0 %v93
    %183 = vmatpush1.msra.mxu0 %v92
    %184 = vmatprep.subr.mxu0 %v97
    %185 = vmatpush1.msra.mxu0 %v96
    %186 = vmatprep.subr.mxu0 %v101
    %187 = vmatpush1.msra.mxu0 %v100
    %188 = vmatprep.subr.mxu0 %v105
    %189 = vmatpush1.msra.mxu0 %v104
    %190 = vmatprep.subr.mxu0 %v109
    %191 = vmatpush1.msra.mxu0 %v108
    %192 = vmatprep.subr.mxu0 %v113
    %193 = vmatpush1.msra.mxu0 %v112
    %194 = vmatprep.subr.mxu0 %v117
    %195 = vmatpush1.msra.mxu0 %v116
    %196 = vmatprep.subr.mxu0 %v121
    %197 = vmatpush1.msra.mxu0 %v120
    %198 = vmatprep.subr.mxu0 %v125
    %199 = vmatpush1.msra.mxu0 %v124
    %200 = vmatprep.subr.mxu0 %v129
    %201 = vmatpush1.msra.mxu0 %v128
    %202 = vmatprep.subr.mxu0 %v133
    %203 = vmatpush1.msra.mxu0 %v132
    %204 = vmatprep.subr.mxu0 %v137
    %205 = vmatpush1.msra.mxu0 %v136
    %206 = vmatprep.subr.mxu0 0.0
    %207 = vmatpush1.msra.mxu0 0.0
    %208 = vmatprep.subr.mxu0 0.0
    %209 = vmatpush1.msra.mxu0 0.0
    %210 = vmatprep.subr.mxu0 0.0
    %211 = vmatpush1.msra.mxu0 0.0
    %212 = vmatprep.subr.mxu0 0.0
    %213 = vmatpush1.msra.mxu0 0.0
    %214 = vmatprep.subr.mxu0 0.0
    %215 = vmatpush1.msra.mxu0 0.0
    %216 = vmatprep.subr.mxu0 0.0
    %217 = vmatpush1.msra.mxu0 0.0
    %218 = vmatprep.subr.mxu0 0.0
    %219 = vmatpush1.msra.mxu0 0.0
    %220 = vmatprep.subr.mxu0 0.0
    %221 = vmatpush1.msra.mxu0 0.0
    %222 = vmatprep.subr.mxu0 0.0
    %223 = vmatpush1.msra.mxu0 0.0
    %224 = vmatprep.subr.mxu0 0.0
    %225 = vmatpush1.msra.mxu0 0.0
    %226 = vmatprep.subr.mxu0 0.0
    %227 = vmatpush1.msra.mxu0 0.0
    %228 = vmatprep.subr.mxu0 0.0
    %229 = vmatpush1.msra.mxu0 0.0
    %230 = vmatprep.mubr.f32.mxu0 %v164
    %231 = vmatmul.mubr.f32.gmra.mrb[0].mxu0 %v58
    %v232 = vpop.f32.mrb[0].mxu0
    %v233 = vadd.f32 %v145, %v232
    %v234 = vpop.f32.mrb[0].mxu0
    %v235 = vadd.f32 %v149, %v234
    %236 = vdwg.mxu0
    %237 = vmatprep.subr.mxu0 %v63
    %238 = vmatpush1.msra.mxu0 %v62
    %239 = vmatprep.subr.mxu0 %v67
    %240 = vmatpush1.msra.mxu0 %v66
    %241 = vmatprep.subr.mxu0 %v71
    %242 = vmatpush1.msra.mxu0 %v70
    %243 = vmatprep.subr.mxu0 %v75
    %244 = vmatpush1.msra.mxu0 %v74
    %245 = vmatprep.subr.mxu0 %v79
    %246 = vmatpush1.msra.mxu0 %v78
    %247 = vmatprep.subr.mxu0 %v83
    %248 = vmatpush1.msra.mxu0 %v82
    %249 = vmatprep.subr.mxu0 %v87
    %250 = vmatpush1.msra.mxu0 %v86
    %251 = vmatprep.subr.mxu0 %v91
    %252 = vmatpush1.msra.mxu0 %v90
    %253 = vmatprep.subr.mxu0 %v95
    %254 = vmatpush1.msra.mxu0 %v94
    %255 = vmatprep.subr.mxu0 %v99
    %256 = vmatpush1.msra.mxu0 %v98
    %257 = vmatprep.subr.mxu0 %v103
    %258 = vmatpush1.msra.mxu0 %v102
    %259 = vmatprep.subr.mxu0 %v107
    %260 = vmatpush1.msra.mxu0 %v106
    %261 = vmatprep.subr.mxu0 %v111
    %262 = vmatpush1.msra.mxu0 %v110
    %263 = vmatprep.subr.mxu0 %v115
    %264 = vmatpush1.msra.mxu0 %v114
    %265 = vmatprep.subr.mxu0 %v119
    %266 = vmatpush1.msra.mxu0 %v118
    %267 = vmatprep.subr.mxu0 %v123
    %268 = vmatpush1.msra.mxu0 %v122
    %269 = vmatprep.subr.mxu0 %v127
    %270 = vmatpush1.msra.mxu0 %v126
    %271 = vmatprep.subr.mxu0 %v131
    %272 = vmatpush1.msra.mxu0 %v130
    %273 = vmatprep.subr.mxu0 %v135
    %274 = vmatpush1.msra.mxu0 %v134
    %275 = vmatprep.subr.mxu0 %v139
    %276 = vmatpush1.msra.mxu0 %v138
    %277 = vmatprep.subr.mxu0 0.0
    %278 = vmatpush1.msra.mxu0 0.0
    %279 = vmatprep.subr.mxu0 0.0
    %280 = vmatpush1.msra.mxu0 0.0
    %281 = vmatprep.subr.mxu0 0.0
    %282 = vmatpush1.msra.mxu0 0.0
    %283 = vmatprep.subr.mxu0 0.0
    %284 = vmatpush1.msra.mxu0 0.0
    %285 = vmatprep.subr.mxu0 0.0
    %286 = vmatpush1.msra.mxu0 0.0
    %287 = vmatprep.subr.mxu0 0.0
    %288 = vmatpush1.msra.mxu0 0.0
    %289 = vmatprep.subr.mxu0 0.0
    %290 = vmatpush1.msra.mxu0 0.0
    %291 = vmatprep.subr.mxu0 0.0
    %292 = vmatpush1.msra.mxu0 0.0
    %293 = vmatprep.subr.mxu0 0.0
    %294 = vmatpush1.msra.mxu0 0.0
    %295 = vmatprep.subr.mxu0 0.0
    %296 = vmatpush1.msra.mxu0 0.0
    %297 = vmatprep.subr.mxu0 0.0
    %298 = vmatpush1.msra.mxu0 0.0
    %299 = vmatprep.subr.mxu0 0.0
    %300 = vmatpush1.msra.mxu0 0.0
    %301 = vmatprep.mubr.f32.mxu0 %v164
    %302 = vmatmul.mubr.f32.gmra.mrb[0].mxu0 %v58
    %v303 = vpop.f32.mrb[0].mxu0
    %v304 = vadd.f32 %v153, %v303
    %v305 = vpop.f32.mrb[0].mxu0
    %v306 = vadd.f32 %v157, %v305
    %307 = vdwg.mxu0
    %v308 = vxor.u32 %v233, 2147483648
    %v309 = vmul.f32 %v308, 1.442695
    %v310 = vpow.pop %v309
    %v311 = vadd.f32 %v310, 1.0
    %v312 = vrcp.pop %v311
    %v313 = vmul.f32 1.0, %v312
    %v314 = vxor.u32 %v235, 2147483648
    %v315 = vmul.f32 %v314, 1.442695
    %v316 = vpow.pop %v315
    %v317 = vadd.f32 %v316, 1.0
    %v318 = vrcp.pop %v317
    %v319 = vmul.f32 1.0, %v318
    %v320 = vtanh.pop %v304
    %v321 = vxor.u32 %v306, 2147483648
    %v322 = vmul.f32 %v321, 1.442695
    %v323 = vpow.pop %v322
    %v324 = vadd.f32 %v323, 1.0
    %v325 = vrcp.pop %v324
    %v326 = vmul.f32 1.0, %v325
    %v327 = vld [vmem:[#allocation5] sm:$0xff]
    %v328 = vmul.f32 %v319, %v327
    %v329 = vmul.f32 %v313, %v320
    %v330 = vadd.f32 %v328, %v329
    %v331 = vtanh.pop %v330
    %v332 = vmul.f32 %v326, %v331
    %333 = vst [vmem:[#allocation9] sm:$0xff] %v330
    %334 = vst [vmem:[#allocation8] sm:$0xff] %v332
    // Predicated region
    $region30: #{tpu_custom_call.1} parent=1 // pred_check
      _
    $region31: #{tpu_custom_call.1} parent=1 // pred_check_branch
      %336 = sbr.rel (0) target = $region33
    $region32: #{tpu_custom_call.1} parent=1 // pred_region
      %s338 = ssub.s32 128, 128
      %339 = vsyncadd [#allocation4], %s338
      %s341 = sshll.u32 [#allocation8], 4
      %s342 = int_to_ptr.vmem [resolvable:$true] %s341
      %344 = dma.vmem_to_hbm [thread:$0]  %s342, 128, %s4, [#allocation4]
    $region33: #{tpu_custom_call.1} parent=1 // pred_fallthru
      _
    // Predicated region
    $region34: #{tpu_custom_call.1} parent=1 // pred_check
      _
    $region35: #{tpu_custom_call.1} parent=1 // pred_check_branch
      %346 = sbr.rel (0) target = $region37
    $region36: #{tpu_custom_call.1} parent=1 // pred_region
      %s348 = ssub.s32 128, 128
      %349 = vsyncadd [#allocation10], %s348
      %s351 = sshll.u32 [#allocation9], 4
      %s352 = int_to_ptr.vmem [resolvable:$true] %s351
      %354 = dma.vmem_to_hbm [thread:$0]  %s352, 128, %s5, [#allocation10]
    $region37: #{tpu_custom_call.1} parent=1 // pred_fallthru
      _
    // Predicated region
    $region38: #{tpu_custom_call.1} parent=1 // pred_check
      _
    $region39: #{tpu_custom_call.1} parent=1 // pred_check_branch
      %356 = sbr.rel (0) target = $region41
    $region40: #{tpu_custom_call.1} parent=1 // pred_region
      %357 = dma.done [#allocation4], 128
    $region41: #{tpu_custom_call.1} parent=1 // pred_fallthru
      _
    // Predicated region
    $region42: #{tpu_custom_call.1} parent=1 // pred_check
      _
    $region43: #{tpu_custom_call.1} parent=1 // pred_check_branch
      %359 = sbr.rel (0) target = $region45
    $region44: #{tpu_custom_call.1} parent=1 // pred_region
      %360 = dma.done [#allocation10], 128
    $region45: #{tpu_custom_call.1} parent=1 // pred_fallthru
      _
    %361 = vsyncpa [#allocation3], 1
    %362 = vsyncpa [#allocation6], 1
    %363 = vsyncpa [#allocation4], 1
    %364 = vsyncpa [#allocation10], 1

</llo_original>
